<compile_context>
chip_gen: v7x
topology: tpu7x:2x2x1
jax: 0.10.0
libtpu: 0.0.40
codegen_flags: <defaults>
</compile_context>

<pallas_src>
import jax
import jax.numpy as jnp
from jax.experimental import pallas as pl
from jax.experimental.pallas import tpu as pltpu

N_INPUT = 7
H1 = 20
H2 = 30
N_OUTPUT = 10

LANE = 128        # lane padding target for weight hidden dims (VMEM-resident)
SUBLANE = 8       # f32 sublane granularity
MAX_TB = 4096     # max batch-tile rows per grid step
VMEM_LIMIT = 48 * 1024 * 1024   # clears v5e 16MiB default scoped VMEM; < v7x 64MiB


def _round_up(n, m):
    return ((n + m - 1) // m) * m


def mlp_kernel(x_ref, w1_ref, b1_ref, w2_ref, b2_ref, w3_ref, b3_ref, o_ref):
    # Matmuls in the weight dtype (bf16 on the fast path), f32 accumulation,
    # bias-add / ReLU in f32.
    dt = w1_ref.dtype
    x = x_ref[...].astype(dt)                                   # (TB, 7)
    h1 = jnp.dot(x, w1_ref[...], preferred_element_type=jnp.float32)
    h1 = jnp.maximum(h1 + b1_ref[...], 0.0)                     # (TB, 128) f32
    h2 = jnp.dot(h1.astype(dt), w2_ref[...], preferred_element_type=jnp.float32)
    h2 = jnp.maximum(h2 + b2_ref[...], 0.0)                     # (TB, 128) f32
    out = jnp.dot(h2.astype(dt), w3_ref[...], preferred_element_type=jnp.float32)
    o_ref[...] = (out + b3_ref[...]).astype(o_ref.dtype)        # (TB, 10)


def pad_params(params, matmul_dtype=jnp.bfloat16):
    """Pad weight hidden dims to 128 lanes ONCE; cast weights for the MXU.

    Padding is mathematically inert: padded rows/cols and bias entries are
    zero and relu(0) == 0.  Biases stay f32 (bias/ReLU run in f32 in-kernel).
    """
    w1, b1, w2, b2, w3, b3 = params
    w1p = jnp.pad(w1, ((0, 0), (0, LANE - H1))).astype(matmul_dtype)          # (7, 128)
    w2p = jnp.pad(w2, ((0, LANE - H1), (0, LANE - H2))).astype(matmul_dtype)  # (128, 128)
    w3p = jnp.pad(w3, ((0, LANE - H2), (0, 0))).astype(matmul_dtype)          # (128, 10)
    b1p = jnp.pad(b1.reshape(1, -1), ((0, 0), (0, LANE - H1))).astype(jnp.float32)
    b2p = jnp.pad(b2.reshape(1, -1), ((0, 0), (0, LANE - H2))).astype(jnp.float32)
    b3p = b3.reshape(1, -1).astype(jnp.float32)                               # (1, 10)
    return (w1p, b1p, w2p, b2p, w3p, b3p)


def mynet_forward(x, padded_params):
    """x: [B, N_INPUT] float32. padded_params: output of pad_params()."""
    w1, b1, w2, b2, w3, b3 = padded_params
    B = x.shape[0]

    # Batch tile: multiple of the 8-row sublane, capped at MAX_TB, and capped
    # at ~half the (sublane-rounded) batch so large batches always produce
    # >= 2 grid steps ("parallel" then shards across v7x's 2 TensorCores).
    B_sub = _round_up(B, SUBLANE)
    half = _round_up(pl.cdiv(B_sub, 2), SUBLANE)
    TB = max(SUBLANE, min(MAX_TB, half))
    B_pad = _round_up(B, TB)

    # Only pad batch rows (zeros) when needed; feature dim stays at 7.
    x_pad = x if B_pad == B else jnp.pad(x, ((0, B_pad - B), (0, 0)))

    grid = (B_pad // TB,)

    x_spec = pl.BlockSpec((TB, N_INPUT), lambda i: (i, 0))
    out_spec = pl.BlockSpec((TB, N_OUTPUT), lambda i: (i, 0))
    # Constant index_maps -> fetched once, VMEM-resident across grid steps.
    w1_spec = pl.BlockSpec((N_INPUT, LANE), lambda i: (0, 0))
    w2_spec = pl.BlockSpec((LANE, LANE), lambda i: (0, 0))
    w3_spec = pl.BlockSpec((LANE, N_OUTPUT), lambda i: (0, 0))
    b12_spec = pl.BlockSpec((1, LANE), lambda i: (0, 0))
    b3_spec = pl.BlockSpec((1, N_OUTPUT), lambda i: (0, 0))

    wbytes = jnp.dtype(w1.dtype).itemsize
    flops = 2 * B_pad * (N_INPUT * LANE + LANE * LANE + LANE * N_OUTPUT)
    bytes_accessed = (
        4 * B_pad * (N_INPUT + N_OUTPUT)                               # x + out
        + wbytes * (N_INPUT * LANE + LANE * LANE + LANE * N_OUTPUT)    # weights
        + 4 * (LANE + LANE + N_OUTPUT))                                # biases

    out_pad = pl.pallas_call(
        mlp_kernel,
        out_shape=jax.ShapeDtypeStruct((B_pad, N_OUTPUT), x.dtype),
        grid=grid,
        in_specs=[x_spec, w1_spec, b12_spec, w2_spec, b12_spec, w3_spec, b3_spec],
        out_specs=out_spec,
        compiler_params=pltpu.CompilerParams(
            dimension_semantics=("parallel",),     # shard batch across v7x TCs
            vmem_limit_bytes=VMEM_LIMIT,           # big TB clears v5e default limit
        ),
        cost_estimate=pl.CostEstimate(
            flops=flops, transcendentals=0, bytes_accessed=bytes_accessed),
    )(x_pad, w1, b1, w2, b2, w3, b3)

    # Trim only padded batch rows; feature dim is already exactly N_OUTPUT.
    return out_pad[:B] if B_pad != B else out_pad


def init_params(key):
    # Deterministic synthetic init (shapes match nn.Linear layers in MyNet).
    k1, k2, k3, k4, k5, k6 = jax.random.split(key, 6)
    w1 = jax.random.normal(k1, (N_INPUT, H1), jnp.float32) * 0.1
    b1 = jax.random.normal(k2, (1, H1), jnp.float32) * 0.1
    w2 = jax.random.normal(k3, (H1, H2), jnp.float32) * 0.1
    b2 = jax.random.normal(k4, (1, H2), jnp.float32) * 0.1
    w3 = jax.random.normal(k5, (H2, N_OUTPUT), jnp.float32) * 0.1
    b3 = jax.random.normal(k6, (1, N_OUTPUT), jnp.float32) * 0.1
    return (w1, b1, w2, b2, w3, b3)


def reference_forward(x, params):
    w1, b1, w2, b2, w3, b3 = params
    h1 = jnp.maximum(x @ w1 + b1, 0.0)
    h2 = jnp.maximum(h1 @ w2 + b2, 0.0)
    return h2 @ w3 + b3


if __name__ == "__main__":
    key = jax.random.PRNGKey(0)
    kx, kp = jax.random.split(key)
    B = 8
    x = jax.random.normal(kx, (B, N_INPUT), jnp.float32)
    params = init_params(kp)
    ref = reference_forward(x, params)

    # 1) f32-weight path: bit-near parity with the PyTorch fp32 module.
    out_f32 = mynet_forward(x, pad_params(params, jnp.float32))
    jax.block_until_ready(out_f32)
    assert out_f32.shape == (B, N_OUTPUT)
    assert jnp.allclose(out_f32, ref, atol=1e-5, rtol=1e-5)

    # 2) bf16-matmul fast path (native MXU on v5e/v6e/v7x), f32 accumulation.
    out_bf16 = mynet_forward(x, pad_params(params, jnp.bfloat16))
    jax.block_until_ready(out_bf16)
    assert out_bf16.shape == (B, N_OUTPUT)
    assert jnp.allclose(out_bf16, ref, atol=3e-2, rtol=3e-2)

    print("KERNEL_OK")
</pallas_src>

<mosaic_0001>
module attributes {stable_mosaic.version = 11 : i64} {
  func.func @mlp_kernel(%arg0: i32, %arg1: memref<8x7xf32, #tpu.memory_space<vmem>>, %arg2: memref<7x128xf32, #tpu.memory_space<vmem>>, %arg3: memref<1x128xf32, #tpu.memory_space<vmem>>, %arg4: memref<128x128xf32, #tpu.memory_space<vmem>>, %arg5: memref<1x128xf32, #tpu.memory_space<vmem>>, %arg6: memref<128x10xf32, #tpu.memory_space<vmem>>, %arg7: memref<1x10xf32, #tpu.memory_space<vmem>>, %arg8: memref<8x10xf32, #tpu.memory_space<vmem>>) attributes {dimension_semantics = [#tpu.dimension_semantics<parallel>], iteration_bounds = array<i64: 1>, scalar_prefetch = 0 : i64, scratch_operands = 0 : i64, tpu.core_type = #tpu.core_type<tc>, window_params = [{transform_indices = @transform_0, window_bounds = array<i64: 8, 7>}, {pipeline_mode = #tpu.pipeline_mode<synchronous>, transform_indices = @transform_1, window_bounds = array<i64: 7, 128>}, {pipeline_mode = #tpu.pipeline_mode<synchronous>, transform_indices = @transform_2, window_bounds = array<i64: 1, 128>}, {pipeline_mode = #tpu.pipeline_mode<synchronous>, transform_indices = @transform_3, window_bounds = array<i64: 128, 128>}, {pipeline_mode = #tpu.pipeline_mode<synchronous>, transform_indices = @transform_4, window_bounds = array<i64: 1, 128>}, {pipeline_mode = #tpu.pipeline_mode<synchronous>, transform_indices = @transform_5, window_bounds = array<i64: 128, 10>}, {pipeline_mode = #tpu.pipeline_mode<synchronous>, transform_indices = @transform_6, window_bounds = array<i64: 1, 10>}, {transform_indices = @transform_7, window_bounds = array<i64: 8, 10>}]} {
    %c0 = arith.constant 0 : index
    %c0_0 = arith.constant 0 : index
    %0 = vector.load %arg1[%c0, %c0_0] : memref<8x7xf32, #tpu.memory_space<vmem>>, vector<8x7xf32>
    %c0_1 = arith.constant 0 : index
    %c0_2 = arith.constant 0 : index
    %1 = vector.load %arg2[%c0_1, %c0_2] : memref<7x128xf32, #tpu.memory_space<vmem>>, vector<7x128xf32>
    %cst = arith.constant dense<0.000000e+00> : vector<8x128xf32>
    %2 = tpu.matmul %0, %1, %cst {dimension_numbers = #tpu.dot_dimension_numbers<[1], [0], [0], [1], [0, 0, 1, 1], [], []>} : vector<8x7xf32>, vector<7x128xf32>, vector<8x128xf32> -> vector<8x128xf32>
    %c0_3 = arith.constant 0 : index
    %c0_4 = arith.constant 0 : index
    %3 = vector.load %arg3[%c0_3, %c0_4] : memref<1x128xf32, #tpu.memory_space<vmem>>, vector<1x128xf32>
    %4 = vector.broadcast %3 : vector<1x128xf32> to vector<8x128xf32>
    %5 = arith.addf %2, %4 : vector<8x128xf32>
    %cst_5 = arith.constant 0.000000e+00 : f32
    %6 = vector.broadcast %cst_5 : f32 to vector<8x128xf32>
    %7 = arith.maximumf %5, %6 : vector<8x128xf32>
    %c0_6 = arith.constant 0 : index
    %c0_7 = arith.constant 0 : index
    %8 = vector.load %arg4[%c0_6, %c0_7] : memref<128x128xf32, #tpu.memory_space<vmem>>, vector<128x128xf32>
    %cst_8 = arith.constant dense<0.000000e+00> : vector<8x128xf32>
    %9 = tpu.matmul %7, %8, %cst_8 {dimension_numbers = #tpu.dot_dimension_numbers<[1], [0], [0], [1], [0, 0, 1, 1], [], []>} : vector<8x128xf32>, vector<128x128xf32>, vector<8x128xf32> -> vector<8x128xf32>
    %c0_9 = arith.constant 0 : index
    %c0_10 = arith.constant 0 : index
    %10 = vector.load %arg5[%c0_9, %c0_10] : memref<1x128xf32, #tpu.memory_space<vmem>>, vector<1x128xf32>
    %11 = vector.broadcast %10 : vector<1x128xf32> to vector<8x128xf32>
    %12 = arith.addf %9, %11 : vector<8x128xf32>
    %cst_11 = arith.constant 0.000000e+00 : f32
    %13 = vector.broadcast %cst_11 : f32 to vector<8x128xf32>
    %14 = arith.maximumf %12, %13 : vector<8x128xf32>
    %c0_12 = arith.constant 0 : index
    %c0_13 = arith.constant 0 : index
    %15 = vector.load %arg6[%c0_12, %c0_13] : memref<128x10xf32, #tpu.memory_space<vmem>>, vector<128x10xf32>
    %cst_14 = arith.constant dense<0.000000e+00> : vector<8x10xf32>
    %16 = tpu.matmul %14, %15, %cst_14 {dimension_numbers = #tpu.dot_dimension_numbers<[1], [0], [0], [1], [0, 0, 1, 1], [], []>} : vector<8x128xf32>, vector<128x10xf32>, vector<8x10xf32> -> vector<8x10xf32>
    %c0_15 = arith.constant 0 : index
    %c0_16 = arith.constant 0 : index
    %17 = vector.load %arg7[%c0_15, %c0_16] : memref<1x10xf32, #tpu.memory_space<vmem>>, vector<1x10xf32>
    %18 = vector.broadcast %17 : vector<1x10xf32> to vector<8x10xf32>
    %19 = arith.addf %16, %18 : vector<8x10xf32>
    %c0_17 = arith.constant 0 : index
    %c0_18 = arith.constant 0 : index
    %20 = vector.load %arg8[%c0_17, %c0_18] : memref<8x10xf32, #tpu.memory_space<vmem>>, vector<8x10xf32>
    tpu.vector_store %arg8[%c0_17, %c0_18], %19 {strides = array<i32>} : memref<8x10xf32, #tpu.memory_space<vmem>>, vector<8x10xf32>,
    return
  }
  func.func @transform_0(%arg0: i32) -> (i32, i32) {
    %c0_i32 = arith.constant 0 : i32
    %c0_i32_0 = arith.constant 0 : i32
    return %arg0, %c0_i32 : i32, i32
  }
  func.func @transform_1(%arg0: i32) -> (i32, i32) {
    %c0_i32 = arith.constant 0 : i32
    %c0_i32_0 = arith.constant 0 : i32
    %c0_i32_1 = arith.constant 0 : i32
    return %c0_i32, %c0_i32_0 : i32, i32
  }
  func.func @transform_2(%arg0: i32) -> (i32, i32) {
    %c0_i32 = arith.constant 0 : i32
    %c0_i32_0 = arith.constant 0 : i32
    %c0_i32_1 = arith.constant 0 : i32
    return %c0_i32, %c0_i32_0 : i32, i32
  }
  func.func @transform_3(%arg0: i32) -> (i32, i32) {
    %c0_i32 = arith.constant 0 : i32
    %c0_i32_0 = arith.constant 0 : i32
    %c0_i32_1 = arith.constant 0 : i32
    return %c0_i32, %c0_i32_0 : i32, i32
  }
  func.func @transform_4(%arg0: i32) -> (i32, i32) {
    %c0_i32 = arith.constant 0 : i32
    %c0_i32_0 = arith.constant 0 : i32
    %c0_i32_1 = arith.constant 0 : i32
    return %c0_i32, %c0_i32_0 : i32, i32
  }
  func.func @transform_5(%arg0: i32) -> (i32, i32) {
    %c0_i32 = arith.constant 0 : i32
    %c0_i32_0 = arith.constant 0 : i32
    %c0_i32_1 = arith.constant 0 : i32
    return %c0_i32, %c0_i32_0 : i32, i32
  }
  func.func @transform_6(%arg0: i32) -> (i32, i32) {
    %c0_i32 = arith.constant 0 : i32
    %c0_i32_0 = arith.constant 0 : i32
    %c0_i32_1 = arith.constant 0 : i32
    return %c0_i32, %c0_i32_0 : i32, i32
  }
  func.func @transform_7(%arg0: i32) -> (i32, i32) {
    %c0_i32 = arith.constant 0 : i32
    %c0_i32_0 = arith.constant 0 : i32
    return %arg0, %c0_i32 : i32, i32
  }
}

</mosaic_0001>

<llo_original>
// kernel: tpu_custom_call.1
$region0: #{tpu_custom_call.1}
  #allocation0 [shape = 'u32[]', space=smem, size = 0x4, offset = 0x4, fixed_abs, tag = 'smem constant byte address 0x4 - core index']
  #allocation1 [shape = 'u32[144,128]{1,0:T(1,128)}', space=vmem, size = 0x12000, scoped, tag = 'internal scratch']
  %s0 = inlined_call_operand.vmem [shape: f32[8,7], index: 0, kind: input, shape index: {}]
  %s1 = inlined_call_operand.vmem [shape: f32[7,128], index: 1, kind: input, shape index: {}]
  %s2 = inlined_call_operand.vmem [shape: f32[1,128], index: 2, kind: input, shape index: {}]
  %s3 = inlined_call_operand.vmem [shape: f32[128,128], index: 3, kind: input, shape index: {}]
  %s4 = inlined_call_operand.vmem [shape: f32[1,128], index: 4, kind: input, shape index: {}]
  %s5 = inlined_call_operand.vmem [shape: f32[128,10], index: 5, kind: input, shape index: {}]
  %s6 = inlined_call_operand.vmem [shape: f32[1,10], index: 6, kind: input, shape index: {}]
  %s7 = inlined_call_operand.hbm [shape: f32[8,10], index: 7, kind: output, shape index: {}]
  %s8 = sld [smem:[#allocation0]]
  $region38: #{tpu_custom_call.1} parent=0
    _
  %s10 = ssub.s32 1, %s8
  %s11 = scalar_select 0, %s10, %s8
  $region1: #{tpu_custom_call.1} parent=0
    #allocation2 [shape = 'u8[4096]{0}', space=vmem, size = 0x1000, scoped, tag = 'output window, operand 0, single buffered']
    #allocation3 [shape = 's32[1]{0}', space=sflag, size = 0x4, scoped, tag = 'scoped memory for tpu_custom_call.1']
    %12 = vsyncpa [#allocation3], 0
    // Predicated region
    $region2: #{tpu_custom_call.1} parent=1 // pred_check
      _
    $region3: #{tpu_custom_call.1} parent=1 // pred_check_branch
      %14 = sbr.rel (0) target = $region5
    $region4: #{tpu_custom_call.1} parent=1 // pred_region
      _
    $region5: #{tpu_custom_call.1} parent=1 // pred_fallthru
      _
    // Predicated region
    $region6: #{tpu_custom_call.1} parent=1 // pred_check
      _
    $region7: #{tpu_custom_call.1} parent=1 // pred_check_branch
      %16 = sbr.rel (0) target = $region9
    $region8: #{tpu_custom_call.1} parent=1 // pred_region
      _
    $region9: #{tpu_custom_call.1} parent=1 // pred_fallthru
      _
    // Predicated region
    $region10: #{tpu_custom_call.1} parent=1 // pred_check
      _
    $region11: #{tpu_custom_call.1} parent=1 // pred_check_branch
      %18 = sbr.rel (0) target = $region13
    $region12: #{tpu_custom_call.1} parent=1 // pred_region
      _
    $region13: #{tpu_custom_call.1} parent=1 // pred_fallthru
      _
    // Predicated region
    $region14: #{tpu_custom_call.1} parent=1 // pred_check
      _
    $region15: #{tpu_custom_call.1} parent=1 // pred_check_branch
      %20 = sbr.rel (0) target = $region17
    $region16: #{tpu_custom_call.1} parent=1 // pred_region
      _
    $region17: #{tpu_custom_call.1} parent=1 // pred_fallthru
      _
    // Predicated region
    $region18: #{tpu_custom_call.1} parent=1 // pred_check
      _
    $region19: #{tpu_custom_call.1} parent=1 // pred_check_branch
      %22 = sbr.rel (0) target = $region21
    $region20: #{tpu_custom_call.1} parent=1 // pred_region
      _
    $region21: #{tpu_custom_call.1} parent=1 // pred_fallthru
      _
    // Predicated region
    $region22: #{tpu_custom_call.1} parent=1 // pred_check
      _
    $region23: #{tpu_custom_call.1} parent=1 // pred_check_branch
      %24 = sbr.rel (0) target = $region25
    $region24: #{tpu_custom_call.1} parent=1 // pred_region
      _
    $region25: #{tpu_custom_call.1} parent=1 // pred_fallthru
      _
    // Predicated region
    $region26: #{tpu_custom_call.1} parent=1 // pred_check
      _
    $region27: #{tpu_custom_call.1} parent=1 // pred_check_branch
      %26 = sbr.rel (0) target = $region29
    $region28: #{tpu_custom_call.1} parent=1 // pred_region
      _
    $region29: #{tpu_custom_call.1} parent=1 // pred_fallthru
      _
    %v27 = vld [vmem:[%s0] sm:$0xff]
    %v28 = vld [vmem:[%s1] sm:$0x7f]
    %v29 = vld [vmem:[%s2] sm:$0x1]
    %v31 = vlaneseq
    %v32 = vshrl.u32 %v31, 7
    %v33 = vsub.s32 0, %v32
    %v34 = vrot.slane %v29, %v33
    %vm36 = vcmask 56320
    %v38 = vsel %vm36, %v27, 0
    %vm40 = vcmask 1046528
    %v42 = vsel %vm40, %v28, 0
    %44 = vmatprep.subr.mxu0 0.0
    %45 = vmatpush1.msra.mxu0 %v42
    %46 = vmatprep.subr.mxu0 0.0
    %47 = vmatpush1.msra.mxu0 0.0
    %48 = vmatprep.subr.mxu0 0.0
    %49 = vmatpush1.msra.mxu0 0.0
    %50 = vmatprep.subr.mxu0 0.0
    %51 = vmatpush1.msra.mxu0 0.0
    %52 = vmatprep.subr.mxu0 0.0
    %53 = vmatpush1.msra.mxu0 0.0
    %54 = vmatprep.subr.mxu0 0.0
    %55 = vmatpush1.msra.mxu0 0.0
    %56 = vmatprep.subr.mxu0 0.0
    %57 = vmatpush1.msra.mxu0 0.0
    %58 = vmatprep.subr.mxu0 0.0
    %59 = vmatpush1.msra.mxu0 0.0
    %60 = vmatprep.subr.mxu0 0.0
    %61 = vmatpush1.msra.mxu0 0.0
    %62 = vmatprep.subr.mxu0 0.0
    %63 = vmatpush1.msra.mxu0 0.0
    %64 = vmatprep.subr.mxu0 0.0
    %65 = vmatpush1.msra.mxu0 0.0
    %66 = vmatprep.subr.mxu0 0.0
    %67 = vmatpush1.msra.mxu0 0.0
    %68 = vmatprep.subr.mxu0 0.0
    %69 = vmatpush1.msra.mxu0 0.0
    %70 = vmatprep.subr.mxu0 0.0
    %71 = vmatpush1.msra.mxu0 0.0
    %72 = vmatprep.subr.mxu0 0.0
    %73 = vmatpush1.msra.mxu0 0.0
    %74 = vmatprep.subr.mxu0 0.0
    %75 = vmatpush1.msra.mxu0 0.0
    %76 = vmatprep.subr.mxu0 0.0
    %77 = vmatpush1.msra.mxu0 0.0
    %78 = vmatprep.subr.mxu0 0.0
    %79 = vmatpush1.msra.mxu0 0.0
    %80 = vmatprep.subr.mxu0 0.0
    %81 = vmatpush1.msra.mxu0 0.0
    %82 = vmatprep.subr.mxu0 0.0
    %83 = vmatpush1.msra.mxu0 0.0
    %84 = vmatprep.subr.mxu0 0.0
    %85 = vmatpush1.msra.mxu0 0.0
    %86 = vmatprep.subr.mxu0 0.0
    %87 = vmatpush1.msra.mxu0 0.0
    %88 = vmatprep.subr.mxu0 0.0
    %89 = vmatpush1.msra.mxu0 0.0
    %90 = vmatprep.subr.mxu0 0.0
    %91 = vmatpush1.msra.mxu0 0.0
    %92 = vmatprep.subr.mxu0 0.0
    %93 = vmatpush1.msra.mxu0 0.0
    %94 = vmatprep.subr.mxu0 0.0
    %95 = vmatpush1.msra.mxu0 0.0
    %96 = vmatprep.subr.mxu0 0.0
    %97 = vmatpush1.msra.mxu0 0.0
    %98 = vmatprep.subr.mxu0 0.0
    %99 = vmatpush1.msra.mxu0 0.0
    %100 = vmatprep.subr.mxu0 0.0
    %101 = vmatpush1.msra.mxu0 0.0
    %102 = vmatprep.subr.mxu0 0.0
    %103 = vmatpush1.msra.mxu0 0.0
    %104 = vmatprep.subr.mxu0 0.0
    %105 = vmatpush1.msra.mxu0 0.0
    %106 = vmatprep.subr.mxu0 0.0
    %107 = vmatpush1.msra.mxu0 0.0
    %108 = vmatprep.mubr.f32.mxu0 0.0
    %109 = vmatmul.mubr.f32.gmra.mrb[0].mxu0 %v38
    %v110 = vpop.f32.mrb[0].mxu0
    %v111 = vadd.f32 %v34, %v110
    %v112 = vpop.f32.mrb[0].mxu0
    %113 = vdwg.mxu0
    %v114 = vmax.f32 %v111, 0.0
    %v115 = vld [vmem:[%s3] sm:$0xff]
    %v116 = vld [vmem:[%s3 + $0x8] sm:$0xff]
    %v117 = vld [vmem:[%s3 + $0x10] sm:$0xff]
    %v118 = vld [vmem:[%s3 + $0x18] sm:$0xff]
    %v119 = vld [vmem:[%s3 + $0x20] sm:$0xff]
    %v120 = vld [vmem:[%s3 + $0x28] sm:$0xff]
    %v121 = vld [vmem:[%s3 + $0x30] sm:$0xff]
    %v122 = vld [vmem:[%s3 + $0x38] sm:$0xff]
    %v123 = vld [vmem:[%s3 + $0x40] sm:$0xff]
    %v124 = vld [vmem:[%s3 + $0x48] sm:$0xff]
    %v125 = vld [vmem:[%s3 + $0x50] sm:$0xff]
    %v126 = vld [vmem:[%s3 + $0x58] sm:$0xff]
    %v127 = vld [vmem:[%s3 + $0x60] sm:$0xff]
    %v128 = vld [vmem:[%s3 + $0x68] sm:$0xff]
    %v129 = vld [vmem:[%s3 + $0x70] sm:$0xff]
    %v130 = vld [vmem:[%s3 + $0x78] sm:$0xff]
    %v131 = vld [vmem:[%s4] sm:$0x1]
    %v133 = vlaneseq
    %v134 = vshrl.u32 %v133, 7
    %v135 = vsub.s32 0, %v134
    %v136 = vrot.slane %v131, %v135
    %138 = vmatprep.subr.mxu0 0.0
    %139 = vmatpush1.msra.mxu0 %v115
    %140 = vmatprep.subr.mxu0 0.0
    %141 = vmatpush1.msra.mxu0 %v116
    %142 = vmatprep.subr.mxu0 0.0
    %143 = vmatpush1.msra.mxu0 %v117
    %144 = vmatprep.subr.mxu0 0.0
    %145 = vmatpush1.msra.mxu0 %v118
    %146 = vmatprep.subr.mxu0 0.0
    %147 = vmatpush1.msra.mxu0 %v119
    %148 = vmatprep.subr.mxu0 0.0
    %149 = vmatpush1.msra.mxu0 %v120
    %150 = vmatprep.subr.mxu0 0.0
    %151 = vmatpush1.msra.mxu0 %v121
    %152 = vmatprep.subr.mxu0 0.0
    %153 = vmatpush1.msra.mxu0 %v122
    %154 = vmatprep.subr.mxu0 0.0
    %155 = vmatpush1.msra.mxu0 %v123
    %156 = vmatprep.subr.mxu0 0.0
    %157 = vmatpush1.msra.mxu0 %v124
    %158 = vmatprep.subr.mxu0 0.0
    %159 = vmatpush1.msra.mxu0 %v125
    %160 = vmatprep.subr.mxu0 0.0
    %161 = vmatpush1.msra.mxu0 %v126
    %162 = vmatprep.subr.mxu0 0.0
    %163 = vmatpush1.msra.mxu0 %v127
    %164 = vmatprep.subr.mxu0 0.0
    %165 = vmatpush1.msra.mxu0 %v128
    %166 = vmatprep.subr.mxu0 0.0
    %167 = vmatpush1.msra.mxu0 %v129
    %168 = vmatprep.subr.mxu0 0.0
    %169 = vmatpush1.msra.mxu0 %v130
    %170 = vmatprep.subr.mxu0 0.0
    %171 = vmatpush1.msra.mxu0 0.0
    %172 = vmatprep.subr.mxu0 0.0
    %173 = vmatpush1.msra.mxu0 0.0
    %174 = vmatprep.subr.mxu0 0.0
    %175 = vmatpush1.msra.mxu0 0.0
    %176 = vmatprep.subr.mxu0 0.0
    %177 = vmatpush1.msra.mxu0 0.0
    %178 = vmatprep.subr.mxu0 0.0
    %179 = vmatpush1.msra.mxu0 0.0
    %180 = vmatprep.subr.mxu0 0.0
    %181 = vmatpush1.msra.mxu0 0.0
    %182 = vmatprep.subr.mxu0 0.0
    %183 = vmatpush1.msra.mxu0 0.0
    %184 = vmatprep.subr.mxu0 0.0
    %185 = vmatpush1.msra.mxu0 0.0
    %186 = vmatprep.subr.mxu0 0.0
    %187 = vmatpush1.msra.mxu0 0.0
    %188 = vmatprep.subr.mxu0 0.0
    %189 = vmatpush1.msra.mxu0 0.0
    %190 = vmatprep.subr.mxu0 0.0
    %191 = vmatpush1.msra.mxu0 0.0
    %192 = vmatprep.subr.mxu0 0.0
    %193 = vmatpush1.msra.mxu0 0.0
    %194 = vmatprep.subr.mxu0 0.0
    %195 = vmatpush1.msra.mxu0 0.0
    %196 = vmatprep.subr.mxu0 0.0
    %197 = vmatpush1.msra.mxu0 0.0
    %198 = vmatprep.subr.mxu0 0.0
    %199 = vmatpush1.msra.mxu0 0.0
    %200 = vmatprep.subr.mxu0 0.0
    %201 = vmatpush1.msra.mxu0 0.0
    %202 = vmatprep.mubr.f32.mxu0 0.0
    %203 = vmatmul.mubr.f32.gmra.mrb[0].mxu0 %v114
    %v204 = vpop.f32.mrb[0].mxu0
    %v205 = vadd.f32 %v136, %v204
    %v206 = vpop.f32.mrb[0].mxu0
    %207 = vdwg.mxu0
    %v208 = vmax.f32 %v205, 0.0
    %v209 = vld [vmem:[%s5] sm:$0xff]
    %v210 = vld [vmem:[%s5 + $0x8] sm:$0xff]
    %v211 = vld [vmem:[%s5 + $0x10] sm:$0xff]
    %v212 = vld [vmem:[%s5 + $0x18] sm:$0xff]
    %v213 = vld [vmem:[%s5 + $0x20] sm:$0xff]
    %v214 = vld [vmem:[%s5 + $0x28] sm:$0xff]
    %v215 = vld [vmem:[%s5 + $0x30] sm:$0xff]
    %v216 = vld [vmem:[%s5 + $0x38] sm:$0xff]
    %v217 = vld [vmem:[%s5 + $0x40] sm:$0xff]
    %v218 = vld [vmem:[%s5 + $0x48] sm:$0xff]
    %v219 = vld [vmem:[%s5 + $0x50] sm:$0xff]
    %v220 = vld [vmem:[%s5 + $0x58] sm:$0xff]
    %v221 = vld [vmem:[%s5 + $0x60] sm:$0xff]
    %v222 = vld [vmem:[%s5 + $0x68] sm:$0xff]
    %v223 = vld [vmem:[%s5 + $0x70] sm:$0xff]
    %v224 = vld [vmem:[%s5 + $0x78] sm:$0xff]
    %v225 = vld [vmem:[%s6] sm:$0x1]
    %v227 = vlaneseq
    %v228 = vshrl.u32 %v227, 7
    %v229 = vsub.s32 0, %v228
    %v230 = vrot.slane %v225, %v229
    %232 = vmatprep.subr.mxu0 0.0
    %233 = vmatpush1.msra.mxu0 %v209
    %234 = vmatprep.subr.mxu0 0.0
    %235 = vmatpush1.msra.mxu0 %v210
    %236 = vmatprep.subr.mxu0 0.0
    %237 = vmatpush1.msra.mxu0 %v211
    %238 = vmatprep.subr.mxu0 0.0
    %239 = vmatpush1.msra.mxu0 %v212
    %240 = vmatprep.subr.mxu0 0.0
    %241 = vmatpush1.msra.mxu0 %v213
    %242 = vmatprep.subr.mxu0 0.0
    %243 = vmatpush1.msra.mxu0 %v214
    %244 = vmatprep.subr.mxu0 0.0
    %245 = vmatpush1.msra.mxu0 %v215
    %246 = vmatprep.subr.mxu0 0.0
    %247 = vmatpush1.msra.mxu0 %v216
    %248 = vmatprep.subr.mxu0 0.0
    %249 = vmatpush1.msra.mxu0 %v217
    %250 = vmatprep.subr.mxu0 0.0
    %251 = vmatpush1.msra.mxu0 %v218
    %252 = vmatprep.subr.mxu0 0.0
    %253 = vmatpush1.msra.mxu0 %v219
    %254 = vmatprep.subr.mxu0 0.0
    %255 = vmatpush1.msra.mxu0 %v220
    %256 = vmatprep.subr.mxu0 0.0
    %257 = vmatpush1.msra.mxu0 %v221
    %258 = vmatprep.subr.mxu0 0.0
    %259 = vmatpush1.msra.mxu0 %v222
    %260 = vmatprep.subr.mxu0 0.0
    %261 = vmatpush1.msra.mxu0 %v223
    %262 = vmatprep.subr.mxu0 0.0
    %263 = vmatpush1.msra.mxu0 %v224
    %264 = vmatprep.subr.mxu0 0.0
    %265 = vmatpush1.msra.mxu0 0.0
    %266 = vmatprep.subr.mxu0 0.0
    %267 = vmatpush1.msra.mxu0 0.0
    %268 = vmatprep.subr.mxu0 0.0
    %269 = vmatpush1.msra.mxu0 0.0
    %270 = vmatprep.subr.mxu0 0.0
    %271 = vmatpush1.msra.mxu0 0.0
    %272 = vmatprep.subr.mxu0 0.0
    %273 = vmatpush1.msra.mxu0 0.0
    %274 = vmatprep.subr.mxu0 0.0
    %275 = vmatpush1.msra.mxu0 0.0
    %276 = vmatprep.subr.mxu0 0.0
    %277 = vmatpush1.msra.mxu0 0.0
    %278 = vmatprep.subr.mxu0 0.0
    %279 = vmatpush1.msra.mxu0 0.0
    %280 = vmatprep.subr.mxu0 0.0
    %281 = vmatpush1.msra.mxu0 0.0
    %282 = vmatprep.subr.mxu0 0.0
    %283 = vmatpush1.msra.mxu0 0.0
    %284 = vmatprep.subr.mxu0 0.0
    %285 = vmatpush1.msra.mxu0 0.0
    %286 = vmatprep.subr.mxu0 0.0
    %287 = vmatpush1.msra.mxu0 0.0
    %288 = vmatprep.subr.mxu0 0.0
    %289 = vmatpush1.msra.mxu0 0.0
    %290 = vmatprep.subr.mxu0 0.0
    %291 = vmatpush1.msra.mxu0 0.0
    %292 = vmatprep.subr.mxu0 0.0
    %293 = vmatpush1.msra.mxu0 0.0
    %294 = vmatprep.subr.mxu0 0.0
    %295 = vmatpush1.msra.mxu0 0.0
    %296 = vmatprep.mubr.f32.mxu0 0.0
    %297 = vmatmul.mubr.f32.gmra.mrb[0].mxu0 %v208
    %v298 = vpop.f32.mrb[0].mxu0
    %v299 = vadd.f32 %v230, %v298
    %v300 = vpop.f32.mrb[0].mxu0
    %301 = vdwg.mxu0
    %vm302 = vcmask 80896
    %303 = vst.msk [vmem:[#allocation2] sm:$0xff] %vm302, %v299
    // Predicated region
    $region30: #{tpu_custom_call.1} parent=1 // pred_check
      _
    $region31: #{tpu_custom_call.1} parent=1 // pred_check_branch
      %305 = sbr.rel (0) target = $region33
    $region32: #{tpu_custom_call.1} parent=1 // pred_region
      %s307 = ssub.s32 128, 128
      %308 = vsyncadd [#allocation3], %s307
      %s310 = sshll.u32 [#allocation2], 4
      %s311 = int_to_ptr.vmem [resolvable:$true] %s310
      %313 = dma.vmem_to_hbm [thread:$0]  %s311, 128, %s7, [#allocation3]
    $region33: #{tpu_custom_call.1} parent=1 // pred_fallthru
      _
    // Predicated region
    $region34: #{tpu_custom_call.1} parent=1 // pred_check
      _
    $region35: #{tpu_custom_call.1} parent=1 // pred_check_branch
      %315 = sbr.rel (0) target = $region37
    $region36: #{tpu_custom_call.1} parent=1 // pred_region
      %316 = dma.done [#allocation3], 128
    $region37: #{tpu_custom_call.1} parent=1 // pred_fallthru
      _
    %317 = vsyncpa [#allocation3], 1

</llo_original>
